<compile_context>
chip_gen: v5e
topology: v5e:2x2
jax: 0.10.0
libtpu: 0.0.40
codegen_flags: <defaults>
</compile_context>

<pallas_src>
import functools

import jax
import jax.numpy as jnp
from jax import lax
from jax.experimental import pallas as pl
from jax.experimental.pallas import tpu as pltpu


def make_divisible(v, divisor=8, min_val=None):
    if min_val is None:
        min_val = divisor
    new_v = max(min_val, int(v + divisor / 2) // divisor * divisor)
    if new_v < 0.9 * v:
        new_v += divisor
    return new_v


# --------------------------------------------------------------------------
# generation-aware budgeting
# --------------------------------------------------------------------------

def _vmem_limit_bytes():
    """Scoped VMEM limit to request: ~3/4 of physical, capped at 100 MiB."""
    try:
        phys = int(pltpu.get_tpu_info().vmem_capacity_bytes)
    except Exception:
        phys = 64 * 1024 * 1024      # conservative (v7x-sized) fallback
    return int(min(phys * 3 // 4, 100 * 1024 * 1024))


def _pick_block_lanes(C, S, dtype_bytes, vmem_limit):
    """Spatial block width (multiple of 128 lanes) sized by bytes, not lanes."""
    LANE = 128
    s_pad = -(-S // LANE) * LANE
    c_pad = -(-C // 8) * 8
    col_bytes = c_pad * dtype_bytes * LANE            # bytes per 128-lane chunk
    target = 4 * 1024 * 1024                          # ~4 MiB per x block
    # pass-2 resident set ~ 4 * block (in + out, double-buffered) <= ~limit/3
    cap = max(col_bytes, vmem_limit // 12)
    blk_bytes = min(target, cap)
    lanes = max(LANE, (blk_bytes // col_bytes) * LANE)
    return int(min(lanes, s_pad))


def _fused_fits(C, S, dtype_bytes, vmem_limit):
    """Can the whole per-batch (C, S) slab live in VMEM (double-buffered in+out)?"""
    c_pad = -(-C // 8) * 8
    s_pad = -(-S // 128) * 128
    slab = c_pad * s_pad * dtype_bytes
    resident = 4 * slab + c_pad * 128 * 4 + (1 << 20)   # + acc scratch + weights margin
    return resident <= int(vmem_limit * 0.7)


# --------------------------------------------------------------------------
# kernels
# --------------------------------------------------------------------------

def _excite(mean, wr_ref, br_ref, we_ref, be_ref):
    """(C,1) channel means -> (C,1) Hsigmoid gate (tiny per-batch FC)."""
    h = jnp.dot(wr_ref[...].astype(jnp.float32), mean,
                preferred_element_type=jnp.float32)
    h = jnp.maximum(h + br_ref[...].astype(jnp.float32), 0.0)         # (M, 1)
    g = jnp.dot(we_ref[...].astype(jnp.float32), h,
                preferred_element_type=jnp.float32)
    g = g + be_ref[...].astype(jnp.float32)                           # (C, 1)
    return jnp.clip(g + 3.0, 0.0, 6.0) * (1.0 / 6.0)                  # Hsigmoid


def _fused_se_kernel(x_ref, wr_ref, br_ref, we_ref, be_ref, o_ref, acc_ref,
                     *, spatial_size):
    # One pass per batch element: x read once from HBM, written once.
    # x_ref/o_ref: (1, C, S); acc_ref: (C, 128) f32 scratch.
    n_full = spatial_size // 128
    rem = spatial_size - n_full * 128

    acc_ref[...] = jnp.zeros_like(acc_ref)

    if n_full > 0:
        @pl.loop(0, n_full, unroll=(n_full <= 8))
        def _(j):
            start = pl.multiple_of(j * 128, 128)
            acc_ref[...] += x_ref[0, :, pl.ds(start, 128)].astype(jnp.float32)

    total = jnp.sum(acc_ref[...], axis=-1, keepdims=True)             # (C, 1)
    if rem:
        tail = x_ref[0, :, pl.ds(n_full * 128, rem)].astype(jnp.float32)
        total = total + jnp.sum(tail, axis=-1, keepdims=True)

    mean = total * (1.0 / float(spatial_size))
    g = _excite(mean, wr_ref, br_ref, we_ref, be_ref)                 # (C, 1)
    # Multiply in x's dtype (no f32 round-trip for bf16 inputs).
    o_ref[0] = x_ref[0] * g.astype(o_ref.dtype)


def _squeeze_excite_kernel(x_ref, wr_ref, br_ref, we_ref, be_ref,
                           scale_ref, acc_ref, *, spatial_size, s_blk, ragged):
    # Pass 1 of the streaming path.
    # x_ref: (1, C, s_blk); scale_ref: (1, C, 1) out; acc_ref: (C, 128) f32.
    s = pl.program_id(1)

    @pl.when(s == 0)
    def _():
        acc_ref[...] = jnp.zeros_like(acc_ref)

    C = acc_ref.shape[0]
    n_chunks = s_blk // 128
    base_col = s * s_blk
    if ragged:
        lane_iota = lax.broadcasted_iota(jnp.int32, (C, 128), 1)

    # VPU accumulation in 128-lane chunks (no per-block XLU reduce).
    @pl.loop(0, n_chunks, unroll=(n_chunks <= 8))
    def _(j):
        start = pl.multiple_of(j * 128, 128)
        chunk = x_ref[0, :, pl.ds(start, 128)].astype(jnp.float32)
        if ragged:
            col = lane_iota + (base_col + start)
            chunk = jnp.where(col < spatial_size, chunk, 0.0)
        acc_ref[...] += chunk

    @pl.when(s == pl.num_programs(1) - 1)
    def _():
        mean = (jnp.sum(acc_ref[...], axis=-1, keepdims=True)
                * (1.0 / float(spatial_size)))
        g = _excite(mean, wr_ref, br_ref, we_ref, be_ref)
        scale_ref[0] = g.astype(scale_ref.dtype)


def _apply_scale_kernel(x_ref, scale_ref, o_ref):
    # Pass 2: out = x * gate (broadcast along the lane axis), in x's dtype.
    o_ref[...] = x_ref[...] * scale_ref[...].astype(o_ref.dtype)


# --------------------------------------------------------------------------
# wrapper
# --------------------------------------------------------------------------

def dynamic_se(x, w_reduce, b_reduce, w_expand, b_expand, reduction=4,
               force_two_pass=False, block_lanes=None):
    """DynamicSE.forward(x, groups=None); weights are the full (max_channel) ones."""
    N, C, D, H, W = x.shape
    num_mid = make_divisible(C // reduction)

    # Active (sliced) 1x1x1 conv weights, flattened to 2-D (wrapper-side, tiny).
    wr = w_reduce[:num_mid, :C].reshape(num_mid, C)
    br = b_reduce[:num_mid].reshape(num_mid, 1)
    we = w_expand[:C, :num_mid].reshape(C, num_mid)
    be = b_expand[:C].reshape(C, 1)

    S = D * H * W
    x3 = x.reshape(N, C, S)            # zero-cost view: spatial on the lane axis
    dtype_bytes = jnp.dtype(x.dtype).itemsize
    vmem_limit = _vmem_limit_bytes()

    # ---- fused one-pass path: read x once, write once ----
    if not force_two_pass and _fused_fits(C, S, dtype_bytes, vmem_limit):
        out3 = pl.pallas_call(
            functools.partial(_fused_se_kernel, spatial_size=S),
            out_shape=jax.ShapeDtypeStruct((N, C, S), x.dtype),
            grid=(N,),
            in_specs=[
                pl.BlockSpec((1, C, S), lambda n: (n, 0, 0)),
                pl.BlockSpec((num_mid, C), lambda n: (0, 0)),
                pl.BlockSpec((num_mid, 1), lambda n: (0, 0)),
                pl.BlockSpec((C, num_mid), lambda n: (0, 0)),
                pl.BlockSpec((C, 1), lambda n: (0, 0)),
            ],
            out_specs=pl.BlockSpec((1, C, S), lambda n: (n, 0, 0)),
            scratch_shapes=[pltpu.VMEM((C, 128), jnp.float32)],
            compiler_params=pltpu.CompilerParams(
                dimension_semantics=("parallel",),
                vmem_limit_bytes=vmem_limit),
        )(x3, wr, br, we, be)
        return out3.reshape(N, C, D, H, W)

    # ---- two-pass streaming path ----
    if block_lanes is not None:
        s_blk = int(-(-block_lanes // 128) * 128)
    else:
        s_blk = _pick_block_lanes(C, S, dtype_bytes, vmem_limit)
    n_sblk = pl.cdiv(S, s_blk)
    ragged = (S % s_blk) != 0          # last block's trailing lanes are masked

    # pass 1: squeeze (global avg pool) + excitation FC -> (N, C, 1) gate
    scale = pl.pallas_call(
        functools.partial(_squeeze_excite_kernel,
                          spatial_size=S, s_blk=s_blk, ragged=ragged),
        out_shape=jax.ShapeDtypeStruct((N, C, 1), jnp.float32),
        grid=(N, n_sblk),
        in_specs=[
            pl.BlockSpec((1, C, s_blk), lambda n, s: (n, 0, s)),
            pl.BlockSpec((num_mid, C), lambda n, s: (0, 0)),
            pl.BlockSpec((num_mid, 1), lambda n, s: (0, 0)),
            pl.BlockSpec((C, num_mid), lambda n, s: (0, 0)),
            pl.BlockSpec((C, 1), lambda n, s: (0, 0)),
        ],
        out_specs=pl.BlockSpec((1, C, 1), lambda n, s: (n, 0, 0)),
        scratch_shapes=[pltpu.VMEM((C, 128), jnp.float32)],
        compiler_params=pltpu.CompilerParams(
            dimension_semantics=("parallel", "arbitrary"),
            vmem_limit_bytes=vmem_limit),
    )(x3, wr, br, we, be)

    # pass 2: out = x * gate.  Partial last blocks: extra lanes are computed
    # but Pallas clips the writeback, so no wrapper pad/slice is needed.
    out3 = pl.pallas_call(
        _apply_scale_kernel,
        out_shape=jax.ShapeDtypeStruct((N, C, S), x.dtype),
        grid=(N, n_sblk),
        in_specs=[
            pl.BlockSpec((1, C, s_blk), lambda n, s: (n, 0, s)),
            pl.BlockSpec((1, C, 1), lambda n, s: (n, 0, 0)),
        ],
        out_specs=pl.BlockSpec((1, C, s_blk), lambda n, s: (n, 0, s)),
        compiler_params=pltpu.CompilerParams(
            dimension_semantics=("parallel", "parallel"),
            vmem_limit_bytes=vmem_limit),
    )(x3, scale)

    return out3.reshape(N, C, D, H, W)


# --------------------------------------------------------------------------
# reference + demo
# --------------------------------------------------------------------------

def _reference(x, w_reduce, b_reduce, w_expand, b_expand, reduction=4):
    N, C, D, H, W = x.shape
    M = make_divisible(C // reduction)
    wr = w_reduce[:M, :C].reshape(M, C)
    we = w_expand[:C, :M].reshape(C, M)
    y = jnp.mean(x, axis=(2, 3, 4))                         # (N, C)
    y = jnp.maximum(y @ wr.T + b_reduce[:M], 0.0)           # (N, M)
    y = y @ we.T + b_expand[:C]                             # (N, C)
    y = jnp.clip(y + 3.0, 0.0, 6.0) / 6.0                   # Hsigmoid
    return x * y[:, :, None, None, None]


if __name__ == "__main__":
    key = jax.random.PRNGKey(0)

    def make_inputs(k, N, C, D, H, W):
        M = make_divisible(C // 4)
        k1, k2, k3, k4, k5 = jax.random.split(k, 5)
        x = jax.random.normal(k1, (N, C, D, H, W), dtype=jnp.float32)
        w_reduce = jax.random.normal(k2, (M, C, 1, 1, 1), dtype=jnp.float32) * 0.3
        b_reduce = jax.random.normal(k3, (M,), dtype=jnp.float32) * 0.1
        w_expand = jax.random.normal(k4, (C, M, 1, 1, 1), dtype=jnp.float32) * 0.3
        b_expand = jax.random.normal(k5, (C,), dtype=jnp.float32) * 0.1
        return x, w_reduce, b_reduce, w_expand, b_expand

    cases = [
        ((2, 32, 4, 16, 16), {}),                                         # fused, lane-aligned
        ((2, 16, 3, 7, 7), {}),                                           # fused, ragged tail
        ((2, 32, 4, 16, 16), dict(force_two_pass=True)),                  # streaming two-pass
        ((2, 16, 3, 7, 7), dict(force_two_pass=True, block_lanes=128)),   # two-pass, masked tail
    ]
    keys = jax.random.split(key, len(cases))
    for k, ((N, C, D, H, W), kw) in zip(keys, cases):
        args = make_inputs(k, N, C, D, H, W)
        out = dynamic_se(*args, **kw)
        jax.block_until_ready(out)
        ref = _reference(*args)
        assert out.shape == args[0].shape
        assert jnp.allclose(out, ref, atol=1e-4, rtol=1e-4), ((N, C, D, H, W), kw)

    print("KERNEL_OK")
</pallas_src>

<mosaic_0001>
module attributes {stable_mosaic.version = 11 : i64} {
  func.func @_fused_se_kernel(%arg0: i32, %arg1: memref<1x32x1024xf32, #tpu.memory_space<vmem>>, %arg2: memref<8x32xf32, #tpu.memory_space<vmem>>, %arg3: memref<8x1xf32, #tpu.memory_space<vmem>>, %arg4: memref<32x8xf32, #tpu.memory_space<vmem>>, %arg5: memref<32x1xf32, #tpu.memory_space<vmem>>, %arg6: memref<1x32x1024xf32, #tpu.memory_space<vmem>>, %arg7: memref<32x128xf32, #tpu.memory_space<vmem>>) attributes {dimension_semantics = [#tpu.dimension_semantics<parallel>], iteration_bounds = array<i64: 2>, scalar_prefetch = 0 : i64, scratch_operands = 1 : i64, tpu.core_type = #tpu.core_type<tc>, window_params = [{transform_indices = @transform_0, window_bounds = array<i64: 1, 32, 1024>}, {pipeline_mode = #tpu.pipeline_mode<synchronous>, transform_indices = @transform_1, window_bounds = array<i64: 8, 32>}, {pipeline_mode = #tpu.pipeline_mode<synchronous>, transform_indices = @transform_2, window_bounds = array<i64: 8, 1>}, {pipeline_mode = #tpu.pipeline_mode<synchronous>, transform_indices = @transform_3, window_bounds = array<i64: 32, 8>}, {pipeline_mode = #tpu.pipeline_mode<synchronous>, transform_indices = @transform_4, window_bounds = array<i64: 32, 1>}, {transform_indices = @transform_5, window_bounds = array<i64: 1, 32, 1024>}]} {
    %cst = arith.constant 0.000000e+00 : f32
    %0 = vector.broadcast %cst : f32 to vector<32x128xf32>
    %c0 = arith.constant 0 : index
    %c0_0 = arith.constant 0 : index
    %1 = vector.load %arg7[%c0, %c0_0] : memref<32x128xf32, #tpu.memory_space<vmem>>, vector<32x128xf32>
    tpu.vector_store %arg7[%c0, %c0_0], %0 {strides = array<i32>} : memref<32x128xf32, #tpu.memory_space<vmem>>, vector<32x128xf32>,
    %c0_i32 = arith.constant 0 : i32
    %c1_i32 = arith.constant 1 : i32
    %2 = arith.muli %c0_i32, %c1_i32 : i32
    %c0_i32_1 = arith.constant 0 : i32
    %3 = arith.addi %c0_i32_1, %2 : i32
    %c128_i32 = arith.constant 128 : i32
    %4 = arith.muli %3, %c128_i32 : i32
    %5 = tpu.assume_multiple %4, 128 : i32
    %c0_2 = arith.constant 0 : index
    %c0_3 = arith.constant 0 : index
    %6 = vector.load %arg7[%c0_2, %c0_3] : memref<32x128xf32, #tpu.memory_space<vmem>>, vector<32x128xf32>
    %c0_4 = arith.constant 0 : index
    %c0_5 = arith.constant 0 : index
    %7 = arith.index_cast %5 : i32 to index
    %8 = vector.load %arg1[%c0_4, %c0_5, %7] : memref<1x32x1024xf32, #tpu.memory_space<vmem>>, vector<1x32x128xf32>
    %9 = vector.shape_cast %8 : vector<1x32x128xf32> to vector<32x128xf32>
    %10 = arith.addf %6, %9 : vector<32x128xf32>
    %c0_6 = arith.constant 0 : index
    %c0_7 = arith.constant 0 : index
    %11 = vector.load %arg7[%c0_6, %c0_7] : memref<32x128xf32, #tpu.memory_space<vmem>>, vector<32x128xf32>
    tpu.vector_store %arg7[%c0_6, %c0_7], %10 {strides = array<i32>} : memref<32x128xf32, #tpu.memory_space<vmem>>, vector<32x128xf32>,
    %c1_i32_8 = arith.constant 1 : i32
    %c1_i32_9 = arith.constant 1 : i32
    %12 = arith.muli %c1_i32_8, %c1_i32_9 : i32
    %c0_i32_10 = arith.constant 0 : i32
    %13 = arith.addi %c0_i32_10, %12 : i32
    %c128_i32_11 = arith.constant 128 : i32
    %14 = arith.muli %13, %c128_i32_11 : i32
    %15 = tpu.assume_multiple %14, 128 : i32
    %c0_12 = arith.constant 0 : index
    %c0_13 = arith.constant 0 : index
    %16 = vector.load %arg7[%c0_12, %c0_13] : memref<32x128xf32, #tpu.memory_space<vmem>>, vector<32x128xf32>
    %c0_14 = arith.constant 0 : index
    %c0_15 = arith.constant 0 : index
    %17 = arith.index_cast %15 : i32 to index
    %18 = vector.load %arg1[%c0_14, %c0_15, %17] : memref<1x32x1024xf32, #tpu.memory_space<vmem>>, vector<1x32x128xf32>
    %19 = vector.shape_cast %18 : vector<1x32x128xf32> to vector<32x128xf32>
    %20 = arith.addf %16, %19 : vector<32x128xf32>
    %c0_16 = arith.constant 0 : index
    %c0_17 = arith.constant 0 : index
    %21 = vector.load %arg7[%c0_16, %c0_17] : memref<32x128xf32, #tpu.memory_space<vmem>>, vector<32x128xf32>
    tpu.vector_store %arg7[%c0_16, %c0_17], %20 {strides = array<i32>} : memref<32x128xf32, #tpu.memory_space<vmem>>, vector<32x128xf32>,
    %c2_i32 = arith.constant 2 : i32
    %c1_i32_18 = arith.constant 1 : i32
    %22 = arith.muli %c2_i32, %c1_i32_18 : i32
    %c0_i32_19 = arith.constant 0 : i32
    %23 = arith.addi %c0_i32_19, %22 : i32
    %c128_i32_20 = arith.constant 128 : i32
    %24 = arith.muli %23, %c128_i32_20 : i32
    %25 = tpu.assume_multiple %24, 128 : i32
    %c0_21 = arith.constant 0 : index
    %c0_22 = arith.constant 0 : index
    %26 = vector.load %arg7[%c0_21, %c0_22] : memref<32x128xf32, #tpu.memory_space<vmem>>, vector<32x128xf32>
    %c0_23 = arith.constant 0 : index
    %c0_24 = arith.constant 0 : index
    %27 = arith.index_cast %25 : i32 to index
    %28 = vector.load %arg1[%c0_23, %c0_24, %27] : memref<1x32x1024xf32, #tpu.memory_space<vmem>>, vector<1x32x128xf32>
    %29 = vector.shape_cast %28 : vector<1x32x128xf32> to vector<32x128xf32>
    %30 = arith.addf %26, %29 : vector<32x128xf32>
    %c0_25 = arith.constant 0 : index
    %c0_26 = arith.constant 0 : index
    %31 = vector.load %arg7[%c0_25, %c0_26] : memref<32x128xf32, #tpu.memory_space<vmem>>, vector<32x128xf32>
    tpu.vector_store %arg7[%c0_25, %c0_26], %30 {strides = array<i32>} : memref<32x128xf32, #tpu.memory_space<vmem>>, vector<32x128xf32>,
    %c3_i32 = arith.constant 3 : i32
    %c1_i32_27 = arith.constant 1 : i32
    %32 = arith.muli %c3_i32, %c1_i32_27 : i32
    %c0_i32_28 = arith.constant 0 : i32
    %33 = arith.addi %c0_i32_28, %32 : i32
    %c128_i32_29 = arith.constant 128 : i32
    %34 = arith.muli %33, %c128_i32_29 : i32
    %35 = tpu.assume_multiple %34, 128 : i32
    %c0_30 = arith.constant 0 : index
    %c0_31 = arith.constant 0 : index
    %36 = vector.load %arg7[%c0_30, %c0_31] : memref<32x128xf32, #tpu.memory_space<vmem>>, vector<32x128xf32>
    %c0_32 = arith.constant 0 : index
    %c0_33 = arith.constant 0 : index
    %37 = arith.index_cast %35 : i32 to index
    %38 = vector.load %arg1[%c0_32, %c0_33, %37] : memref<1x32x1024xf32, #tpu.memory_space<vmem>>, vector<1x32x128xf32>
    %39 = vector.shape_cast %38 : vector<1x32x128xf32> to vector<32x128xf32>
    %40 = arith.addf %36, %39 : vector<32x128xf32>
    %c0_34 = arith.constant 0 : index
    %c0_35 = arith.constant 0 : index
    %41 = vector.load %arg7[%c0_34, %c0_35] : memref<32x128xf32, #tpu.memory_space<vmem>>, vector<32x128xf32>
    tpu.vector_store %arg7[%c0_34, %c0_35], %40 {strides = array<i32>} : memref<32x128xf32, #tpu.memory_space<vmem>>, vector<32x128xf32>,
    %c4_i32 = arith.constant 4 : i32
    %c1_i32_36 = arith.constant 1 : i32
    %42 = arith.muli %c4_i32, %c1_i32_36 : i32
    %c0_i32_37 = arith.constant 0 : i32
    %43 = arith.addi %c0_i32_37, %42 : i32
    %c128_i32_38 = arith.constant 128 : i32
    %44 = arith.muli %43, %c128_i32_38 : i32
    %45 = tpu.assume_multiple %44, 128 : i32
    %c0_39 = arith.constant 0 : index
    %c0_40 = arith.constant 0 : index
    %46 = vector.load %arg7[%c0_39, %c0_40] : memref<32x128xf32, #tpu.memory_space<vmem>>, vector<32x128xf32>
    %c0_41 = arith.constant 0 : index
    %c0_42 = arith.constant 0 : index
    %47 = arith.index_cast %45 : i32 to index
    %48 = vector.load %arg1[%c0_41, %c0_42, %47] : memref<1x32x1024xf32, #tpu.memory_space<vmem>>, vector<1x32x128xf32>
    %49 = vector.shape_cast %48 : vector<1x32x128xf32> to vector<32x128xf32>
    %50 = arith.addf %46, %49 : vector<32x128xf32>
    %c0_43 = arith.constant 0 : index
    %c0_44 = arith.constant 0 : index
    %51 = vector.load %arg7[%c0_43, %c0_44] : memref<32x128xf32, #tpu.memory_space<vmem>>, vector<32x128xf32>
    tpu.vector_store %arg7[%c0_43, %c0_44], %50 {strides = array<i32>} : memref<32x128xf32, #tpu.memory_space<vmem>>, vector<32x128xf32>,
    %c5_i32 = arith.constant 5 : i32
    %c1_i32_45 = arith.constant 1 : i32
    %52 = arith.muli %c5_i32, %c1_i32_45 : i32
    %c0_i32_46 = arith.constant 0 : i32
    %53 = arith.addi %c0_i32_46, %52 : i32
    %c128_i32_47 = arith.constant 128 : i32
    %54 = arith.muli %53, %c128_i32_47 : i32
    %55 = tpu.assume_multiple %54, 128 : i32
    %c0_48 = arith.constant 0 : index
    %c0_49 = arith.constant 0 : index
    %56 = vector.load %arg7[%c0_48, %c0_49] : memref<32x128xf32, #tpu.memory_space<vmem>>, vector<32x128xf32>
    %c0_50 = arith.constant 0 : index
    %c0_51 = arith.constant 0 : index
    %57 = arith.index_cast %55 : i32 to index
    %58 = vector.load %arg1[%c0_50, %c0_51, %57] : memref<1x32x1024xf32, #tpu.memory_space<vmem>>, vector<1x32x128xf32>
    %59 = vector.shape_cast %58 : vector<1x32x128xf32> to vector<32x128xf32>
    %60 = arith.addf %56, %59 : vector<32x128xf32>
    %c0_52 = arith.constant 0 : index
    %c0_53 = arith.constant 0 : index
    %61 = vector.load %arg7[%c0_52, %c0_53] : memref<32x128xf32, #tpu.memory_space<vmem>>, vector<32x128xf32>
    tpu.vector_store %arg7[%c0_52, %c0_53], %60 {strides = array<i32>} : memref<32x128xf32, #tpu.memory_space<vmem>>, vector<32x128xf32>,
    %c6_i32 = arith.constant 6 : i32
    %c1_i32_54 = arith.constant 1 : i32
    %62 = arith.muli %c6_i32, %c1_i32_54 : i32
    %c0_i32_55 = arith.constant 0 : i32
    %63 = arith.addi %c0_i32_55, %62 : i32
    %c128_i32_56 = arith.constant 128 : i32
    %64 = arith.muli %63, %c128_i32_56 : i32
    %65 = tpu.assume_multiple %64, 128 : i32
    %c0_57 = arith.constant 0 : index
    %c0_58 = arith.constant 0 : index
    %66 = vector.load %arg7[%c0_57, %c0_58] : memref<32x128xf32, #tpu.memory_space<vmem>>, vector<32x128xf32>
    %c0_59 = arith.constant 0 : index
    %c0_60 = arith.constant 0 : index
    %67 = arith.index_cast %65 : i32 to index
    %68 = vector.load %arg1[%c0_59, %c0_60, %67] : memref<1x32x1024xf32, #tpu.memory_space<vmem>>, vector<1x32x128xf32>
    %69 = vector.shape_cast %68 : vector<1x32x128xf32> to vector<32x128xf32>
    %70 = arith.addf %66, %69 : vector<32x128xf32>
    %c0_61 = arith.constant 0 : index
    %c0_62 = arith.constant 0 : index
    %71 = vector.load %arg7[%c0_61, %c0_62] : memref<32x128xf32, #tpu.memory_space<vmem>>, vector<32x128xf32>
    tpu.vector_store %arg7[%c0_61, %c0_62], %70 {strides = array<i32>} : memref<32x128xf32, #tpu.memory_space<vmem>>, vector<32x128xf32>,
    %c7_i32 = arith.constant 7 : i32
    %c1_i32_63 = arith.constant 1 : i32
    %72 = arith.muli %c7_i32, %c1_i32_63 : i32
    %c0_i32_64 = arith.constant 0 : i32
    %73 = arith.addi %c0_i32_64, %72 : i32
    %c128_i32_65 = arith.constant 128 : i32
    %74 = arith.muli %73, %c128_i32_65 : i32
    %75 = tpu.assume_multiple %74, 128 : i32
    %c0_66 = arith.constant 0 : index
    %c0_67 = arith.constant 0 : index
    %76 = vector.load %arg7[%c0_66, %c0_67] : memref<32x128xf32, #tpu.memory_space<vmem>>, vector<32x128xf32>
    %c0_68 = arith.constant 0 : index
    %c0_69 = arith.constant 0 : index
    %77 = arith.index_cast %75 : i32 to index
    %78 = vector.load %arg1[%c0_68, %c0_69, %77] : memref<1x32x1024xf32, #tpu.memory_space<vmem>>, vector<1x32x128xf32>
    %79 = vector.shape_cast %78 : vector<1x32x128xf32> to vector<32x128xf32>
    %80 = arith.addf %76, %79 : vector<32x128xf32>
    %c0_70 = arith.constant 0 : index
    %c0_71 = arith.constant 0 : index
    %81 = vector.load %arg7[%c0_70, %c0_71] : memref<32x128xf32, #tpu.memory_space<vmem>>, vector<32x128xf32>
    tpu.vector_store %arg7[%c0_70, %c0_71], %80 {strides = array<i32>} : memref<32x128xf32, #tpu.memory_space<vmem>>, vector<32x128xf32>,
    %c8_i32 = arith.constant 8 : i32
    %c0_72 = arith.constant 0 : index
    %c0_73 = arith.constant 0 : index
    %82 = vector.load %arg7[%c0_72, %c0_73] : memref<32x128xf32, #tpu.memory_space<vmem>>, vector<32x128xf32>
    %cst_74 = arith.constant dense<0.000000e+00> : vector<32xf32>
    %83 = vector.multi_reduction <add>, %82, %cst_74 [1] : vector<32x128xf32> to vector<32xf32>
    %84 = vector.shape_cast %83 : vector<32xf32> to vector<32x1xf32>
    %cst_75 = arith.constant 9.765625E-4 : f32
    %85 = vector.broadcast %cst_75 : f32 to vector<32x1xf32>
    %86 = arith.mulf %84, %85 : vector<32x1xf32>
    %c0_76 = arith.constant 0 : index
    %c0_77 = arith.constant 0 : index
    %87 = vector.load %arg2[%c0_76, %c0_77] : memref<8x32xf32, #tpu.memory_space<vmem>>, vector<8x32xf32>
    %cst_78 = arith.constant dense<0.000000e+00> : vector<8x1xf32>
    %88 = tpu.matmul %87, %86, %cst_78 {dimension_numbers = #tpu.dot_dimension_numbers<[1], [0], [0], [1], [0, 0, 1, 1], [], []>} : vector<8x32xf32>, vector<32x1xf32>, vector<8x1xf32> -> vector<8x1xf32>
    %c0_79 = arith.constant 0 : index
    %c0_80 = arith.constant 0 : index
    %89 = vector.load %arg3[%c0_79, %c0_80] : memref<8x1xf32, #tpu.memory_space<vmem>>, vector<8x1xf32>
    %90 = arith.addf %88, %89 : vector<8x1xf32>
    %cst_81 = arith.constant 0.000000e+00 : f32
    %91 = vector.broadcast %cst_81 : f32 to vector<8x1xf32>
    %92 = arith.maximumf %90, %91 : vector<8x1xf32>
    %c0_82 = arith.constant 0 : index
    %c0_83 = arith.constant 0 : index
    %93 = vector.load %arg4[%c0_82, %c0_83] : memref<32x8xf32, #tpu.memory_space<vmem>>, vector<32x8xf32>
    %cst_84 = arith.constant dense<0.000000e+00> : vector<32x1xf32>
    %94 = tpu.matmul %93, %92, %cst_84 {dimension_numbers = #tpu.dot_dimension_numbers<[1], [0], [0], [1], [0, 0, 1, 1], [], []>} : vector<32x8xf32>, vector<8x1xf32>, vector<32x1xf32> -> vector<32x1xf32>
    %c0_85 = arith.constant 0 : index
    %c0_86 = arith.constant 0 : index
    %95 = vector.load %arg5[%c0_85, %c0_86] : memref<32x1xf32, #tpu.memory_space<vmem>>, vector<32x1xf32>
    %96 = arith.addf %94, %95 : vector<32x1xf32>
    %cst_87 = arith.constant 3.000000e+00 : f32
    %97 = vector.broadcast %cst_87 : f32 to vector<32x1xf32>
    %98 = arith.addf %96, %97 : vector<32x1xf32>
    %cst_88 = arith.constant 0.000000e+00 : f32
    %cst_89 = arith.constant 6.000000e+00 : f32
    %99 = vector.broadcast %cst_88 : f32 to vector<32x1xf32>
    %100 = arith.maximumf %99, %98 : vector<32x1xf32>
    %101 = vector.broadcast %cst_89 : f32 to vector<32x1xf32>
    %102 = arith.minimumf %101, %100 : vector<32x1xf32>
    %cst_90 = arith.constant 0.166666672 : f32
    %103 = vector.broadcast %cst_90 : f32 to vector<32x1xf32>
    %104 = arith.mulf %102, %103 : vector<32x1xf32>
    %c0_91 = arith.constant 0 : index
    %c0_92 = arith.constant 0 : index
    %c0_93 = arith.constant 0 : index
    %105 = vector.load %arg1[%c0_91, %c0_92, %c0_93] : memref<1x32x1024xf32, #tpu.memory_space<vmem>>, vector<1x32x1024xf32>
    %106 = vector.shape_cast %105 : vector<1x32x1024xf32> to vector<32x1024xf32>
    %107 = vector.broadcast %104 : vector<32x1xf32> to vector<32x1024xf32>
    %108 = arith.mulf %106, %107 : vector<32x1024xf32>
    %c0_94 = arith.constant 0 : index
    %c0_95 = arith.constant 0 : index
    %c0_96 = arith.constant 0 : index
    %109 = vector.load %arg6[%c0_94, %c0_95, %c0_96] : memref<1x32x1024xf32, #tpu.memory_space<vmem>>, vector<1x32x1024xf32>
    %110 = vector.shape_cast %109 : vector<1x32x1024xf32> to vector<32x1024xf32>
    %111 = vector.shape_cast %108 : vector<32x1024xf32> to vector<1x32x1024xf32>
    tpu.vector_store %arg6[%c0_94, %c0_95, %c0_96], %111 {strides = array<i32>} : memref<1x32x1024xf32, #tpu.memory_space<vmem>>, vector<1x32x1024xf32>,
    return
  }
  func.func @transform_0(%arg0: i32) -> (i32, i32, i32) {
    %c0_i32 = arith.constant 0 : i32
    %c0_i32_0 = arith.constant 0 : i32
    %c0_i32_1 = arith.constant 0 : i32
    return %arg0, %c0_i32, %c0_i32_0 : i32, i32, i32
  }
  func.func @transform_1(%arg0: i32) -> (i32, i32) {
    %c0_i32 = arith.constant 0 : i32
    %c0_i32_0 = arith.constant 0 : i32
    %c0_i32_1 = arith.constant 0 : i32
    return %c0_i32, %c0_i32_0 : i32, i32
  }
  func.func @transform_2(%arg0: i32) -> (i32, i32) {
    %c0_i32 = arith.constant 0 : i32
    %c0_i32_0 = arith.constant 0 : i32
    %c0_i32_1 = arith.constant 0 : i32
    return %c0_i32, %c0_i32_0 : i32, i32
  }
  func.func @transform_3(%arg0: i32) -> (i32, i32) {
    %c0_i32 = arith.constant 0 : i32
    %c0_i32_0 = arith.constant 0 : i32
    %c0_i32_1 = arith.constant 0 : i32
    return %c0_i32, %c0_i32_0 : i32, i32
  }
  func.func @transform_4(%arg0: i32) -> (i32, i32) {
    %c0_i32 = arith.constant 0 : i32
    %c0_i32_0 = arith.constant 0 : i32
    %c0_i32_1 = arith.constant 0 : i32
    return %c0_i32, %c0_i32_0 : i32, i32
  }
  func.func @transform_5(%arg0: i32) -> (i32, i32, i32) {
    %c0_i32 = arith.constant 0 : i32
    %c0_i32_0 = arith.constant 0 : i32
    %c0_i32_1 = arith.constant 0 : i32
    return %arg0, %c0_i32, %c0_i32_0 : i32, i32, i32
  }
}

</mosaic_0001>

<llo_original>
// kernel: tpu_custom_call.1
$region0: #{tpu_custom_call.1}
  #allocation0 [shape = 'u32[]', space=smem, size = 0x4, offset = 0x4, fixed_abs, tag = 'smem constant byte address 0x4 - core index']
  #allocation1 [shape = 'u32[72,128]{1,0:T(1,128)}', space=vmem, size = 0x9000, scoped, tag = 'internal scratch']
  #allocation2 [shape = 'f32[32,128]{1,0:T(8,128)}', space=vmem, size = 0x4000, scoped, tag = 'scratch operand']
  %s0 = inlined_call_operand.hbm [shape: f32[2,32,1024], index: 0, kind: input, shape index: {}]
  %s1 = inlined_call_operand.vmem [shape: f32[8,32], index: 1, kind: input, shape index: {}]
  %s2 = inlined_call_operand.vmem [shape: f32[8,1], index: 2, kind: input, shape index: {}]
  %s3 = inlined_call_operand.vmem [shape: f32[32,8], index: 3, kind: input, shape index: {}]
  %s4 = inlined_call_operand.vmem [shape: f32[32,1], index: 4, kind: input, shape index: {}]
  %s5 = inlined_call_operand.hbm [shape: f32[2,32,1024], index: 5, kind: output, shape index: {}]
  %s6 = sld [smem:[#allocation0]]
  $region57: #{tpu_custom_call.1} parent=0
    _
  %s8 = ssub.s32 1, %s6
  %s9 = scalar_select 0, %s8, %s6
  $region1: #{tpu_custom_call.1} parent=0
    #allocation3 [shape = 'u8[262144]{0}', space=vmem, size = 0x40000, scoped, tag = 'input window, operand 0']
    #allocation4 [shape = 's32[2]{0}', space=sflag, size = 0x8, scoped, tag = 'scoped memory for tpu_custom_call.1']
    #allocation5 [shape = 's32[2]{0}', space=sflag, size = 0x8, scoped, tag = 'scoped memory for tpu_custom_call.1']
    #allocation6 [shape = 'u8[262144]{0}', space=vmem, size = 0x40000, scoped, tag = 'output window, operand 0']
    %10 = vsyncpa [#allocation4], 0
    %s11 = scalar_lea.sflag [#allocation4], 1
    %12 = vsyncpa %s11, 0
    %13 = vsyncpa [#allocation5], 0
    %s14 = scalar_lea.sflag [#allocation5], 1
    %15 = vsyncpa %s14, 0
    loop: start=0, step=1, limit=4
    $region2: #{tpu_custom_call.1} parent=1 // loop_pre_header
      _
    $region3: #{tpu_custom_call.1} parent=1 // loop_header
      %s17 = sphi 0, %s21
      %p18 = scmp.ge.s32.totalorder %s17, 4
      %s27 = sphi 0, %s29
      %s30 = sphi 0, %s27
      %s31 = sphi 0, %s30
      %s47 = sphi 0, %s31
      %s51 = sphi 0, %s51
      %s53 = sphi 0, %s51
      %s54 = sphi 0, %s53
      %s68 = sphi 0, %s54
      %s72 = sphi 0, %s72
      %s74 = sphi 0, %s72
      %s75 = sphi 0, %s74
      %s89 = sphi 0, %s75
      %s93 = sphi 0, %s93
      %s95 = sphi 0, %s93
      %s96 = sphi 0, %s95
      %s110 = sphi 0, %s96
      %s114 = sphi 0, %s114
      %s116 = sphi 0, %s114
      %s117 = sphi 0, %s116
      %s131 = sphi 0, %s117
      %s137 = sphi 0, %s139
      %s140 = sphi 0, %s137
      %s141 = sphi 0, %s140
      %s157 = sphi 0, %s141
    $region4: #{tpu_custom_call.1} parent=1 // loop_header_branch
      %20 = sbr.rel (%p18) target = $region8
    $region5: #{tpu_custom_call.1} parent=1 // loop_body
      %s22 = ssub.s32 %s17, 1
      %s23 = ssub.s32 %s17, 2
      %s24 = sadd.s32 %s17, 1
      %s25 = ssub.s32 %s17, %s24
      %p26 = scmp.eq.s32.totalorder %s25, 0
      %s28 = sadd.s32 %s27, 1
      %s29 = scalar_select %p26, %s27, %s28
      %p32 = pneg %p26
      %p33 = scmp.eq.s32.totalorder %s17, 1
      %p34 = por %p32, %p33
      %p35 = scmp.ne.s32.totalorder %s27, %s30
      %p36 = scmp.eq.s32.totalorder %s17, 0
      %p37 = por %p35, %p36
      %p38 = scmp.ne.s32.totalorder %s27, %s30
      %p39 = scmp.eq.s32.totalorder %s22, 1
      %p40 = por %p38, %p39
      %p41 = scmp.ne.s32.totalorder %s30, %s31
      %p42 = scmp.eq.s32.totalorder %s22, 0
      %p43 = por %p41, %p42
      %p44 = scmp.ne.s32.totalorder %s30, %s31
      %p45 = scmp.eq.s32.totalorder %s23, 1
      %p46 = por %p44, %p45
      %p48 = scmp.ne.s32.totalorder %s31, %s47
      %p49 = scmp.eq.s32.totalorder %s23, 0
      %p50 = por %p48, %p49
      %s52 = sadd.s32 %s51, 1
      %p55 = scmp.eq.s32.totalorder %s17, 1
      %p56 = scmp.ne.s32.totalorder %s51, %s53
      %p57 = scmp.eq.s32.totalorder %s17, 0
      %p58 = por %p56, %p57
      %p59 = scmp.ne.s32.totalorder %s51, %s53
      %p60 = scmp.eq.s32.totalorder %s22, 1
      %p61 = por %p59, %p60
      %p62 = scmp.ne.s32.totalorder %s53, %s54
      %p63 = scmp.eq.s32.totalorder %s22, 0
      %p64 = por %p62, %p63
      %p65 = scmp.ne.s32.totalorder %s53, %s54
      %p66 = scmp.eq.s32.totalorder %s23, 1
      %p67 = por %p65, %p66
      %p69 = scmp.ne.s32.totalorder %s54, %s68
      %p70 = scmp.eq.s32.totalorder %s23, 0
      %p71 = por %p69, %p70
      %s73 = sadd.s32 %s72, 1
      %p76 = scmp.eq.s32.totalorder %s17, 1
      %p77 = scmp.ne.s32.totalorder %s72, %s74
      %p78 = scmp.eq.s32.totalorder %s17, 0
      %p79 = por %p77, %p78
      %p80 = scmp.ne.s32.totalorder %s72, %s74
      %p81 = scmp.eq.s32.totalorder %s22, 1
      %p82 = por %p80, %p81
      %p83 = scmp.ne.s32.totalorder %s74, %s75
      %p84 = scmp.eq.s32.totalorder %s22, 0
      %p85 = por %p83, %p84
      %p86 = scmp.ne.s32.totalorder %s74, %s75
      %p87 = scmp.eq.s32.totalorder %s23, 1
      %p88 = por %p86, %p87
      %p90 = scmp.ne.s32.totalorder %s75, %s89
      %p91 = scmp.eq.s32.totalorder %s23, 0
      %p92 = por %p90, %p91
      %s94 = sadd.s32 %s93, 1
      %p97 = scmp.eq.s32.totalorder %s17, 1
      %p98 = scmp.ne.s32.totalorder %s93, %s95
      %p99 = scmp.eq.s32.totalorder %s17, 0
      %p100 = por %p98, %p99
      %p101 = scmp.ne.s32.totalorder %s93, %s95
      %p102 = scmp.eq.s32.totalorder %s22, 1
      %p103 = por %p101, %p102
      %p104 = scmp.ne.s32.totalorder %s95, %s96
      %p105 = scmp.eq.s32.totalorder %s22, 0
      %p106 = por %p104, %p105
      %p107 = scmp.ne.s32.totalorder %s95, %s96
      %p108 = scmp.eq.s32.totalorder %s23, 1
      %p109 = por %p107, %p108
      %p111 = scmp.ne.s32.totalorder %s96, %s110
      %p112 = scmp.eq.s32.totalorder %s23, 0
      %p113 = por %p111, %p112
      %s115 = sadd.s32 %s114, 1
      %p118 = scmp.eq.s32.totalorder %s17, 1
      %p119 = scmp.ne.s32.totalorder %s114, %s116
      %p120 = scmp.eq.s32.totalorder %s17, 0
      %p121 = por %p119, %p120
      %p122 = scmp.ne.s32.totalorder %s114, %s116
      %p123 = scmp.eq.s32.totalorder %s22, 1
      %p124 = por %p122, %p123
      %p125 = scmp.ne.s32.totalorder %s116, %s117
      %p126 = scmp.eq.s32.totalorder %s22, 0
      %p127 = por %p125, %p126
      %p128 = scmp.ne.s32.totalorder %s116, %s117
      %p129 = scmp.eq.s32.totalorder %s23, 1
      %p130 = por %p128, %p129
      %p132 = scmp.ne.s32.totalorder %s117, %s131
      %p133 = scmp.eq.s32.totalorder %s23, 0
      %p134 = por %p132, %p133
      %s135 = ssub.s32 %s17, %s24
      %p136 = scmp.eq.s32.totalorder %s135, 0
      %s138 = sadd.s32 %s137, 1
      %s139 = scalar_select %p136, %s137, %s138
      %p142 = pneg %p136
      %p143 = scmp.eq.s32.totalorder %s17, 1
      %p144 = por %p142, %p143
      %p145 = scmp.ne.s32.totalorder %s137, %s140
      %p146 = scmp.eq.s32.totalorder %s17, 0
      %p147 = por %p145, %p146
      %p148 = scmp.ne.s32.totalorder %s137, %s140
      %p149 = scmp.eq.s32.totalorder %s22, 1
      %p150 = por %p148, %p149
      %p151 = scmp.ne.s32.totalorder %s140, %s141
      %p152 = scmp.eq.s32.totalorder %s22, 0
      %p153 = por %p151, %p152
      %p154 = scmp.ne.s32.totalorder %s140, %s141
      %p155 = scmp.eq.s32.totalorder %s23, 1
      %p156 = por %p154, %p155
      %p158 = scmp.ne.s32.totalorder %s141, %s157
      %p159 = scmp.eq.s32.totalorder %s23, 0
      %p160 = por %p158, %p159
      %p161 = scmp.le.s32.totalorder 1, %s17
      %p162 = scmp.lt.s32.totalorder %s17, 3
      %p163 = pnand %p161, %p162
      %p164 = pneg %p163
      // Predicated region
      $region9: #{tpu_custom_call.1} parent=5 // pred_check
        _
      $region10: #{tpu_custom_call.1} parent=5 // pred_check_branch
        %166 = sbr.rel (%p163) target = $region12
      $region11: #{tpu_custom_call.1} parent=5 // pred_region
        %s167 = ssub.s32 %s17, 1
        // Predicated region
        $region13: #{tpu_custom_call.1} parent=11 // pred_check
          %p168 = pneg %p64
        $region14: #{tpu_custom_call.1} parent=11 // pred_check_branch
          %170 = sbr.rel (%p168) target = $region16
        $region15: #{tpu_custom_call.1} parent=11 // pred_region
          _
        $region16: #{tpu_custom_call.1} parent=11 // pred_fallthru
          _
        // Predicated region
        $region17: #{tpu_custom_call.1} parent=11 // pred_check
          %p171 = pneg %p85
        $region18: #{tpu_custom_call.1} parent=11 // pred_check_branch
          %173 = sbr.rel (%p171) target = $region20
        $region19: #{tpu_custom_call.1} parent=11 // pred_region
          _
        $region20: #{tpu_custom_call.1} parent=11 // pred_fallthru
          _
        // Predicated region
        $region21: #{tpu_custom_call.1} parent=11 // pred_check
          %p174 = pneg %p106
        $region22: #{tpu_custom_call.1} parent=11 // pred_check_branch
          %176 = sbr.rel (%p174) target = $region24
        $region23: #{tpu_custom_call.1} parent=11 // pred_region
          _
        $region24: #{tpu_custom_call.1} parent=11 // pred_fallthru
          _
        // Predicated region
        $region25: #{tpu_custom_call.1} parent=11 // pred_check
          %p177 = pneg %p127
        $region26: #{tpu_custom_call.1} parent=11 // pred_check_branch
          %179 = sbr.rel (%p177) target = $region28
        $region27: #{tpu_custom_call.1} parent=11 // pred_region
          _
        $region28: #{tpu_custom_call.1} parent=11 // pred_fallthru
          _
      $region12: #{tpu_custom_call.1} parent=5 // pred_fallthru
        _
      %p180 = scmp.lt.s32.totalorder %s17, 2
      // Predicated region
      $region29: #{tpu_custom_call.1} parent=5 // pred_check
        %p181 = pneg %p180
      $region30: #{tpu_custom_call.1} parent=5 // pred_check_branch
        %183 = sbr.rel (%p181) target = $region32
      $region31: #{tpu_custom_call.1} parent=5 // pred_region
        // Predicated region
        $region33: #{tpu_custom_call.1} parent=31 // pred_check
          %p184 = pneg %p37
        $region34: #{tpu_custom_call.1} parent=31 // pred_check_branch
          %186 = sbr.rel (%p184) target = $region36
        $region35: #{tpu_custom_call.1} parent=31 // pred_region
          %s187 = sand.u32 %s27, 1
          %s188 = scalar_lea.sflag [#allocation4], %s187
          %s189 = sand.u32 %s27, 1
          %s190 = smul.addr %s189, 256
          %s191 = scalar_lea.vmem [#allocation3], %s190
          %193 = vsyncadd %s188, 0
          %s194 = smul.addr %s17, 32
          %s195 = smul.addr %s194, 8
          %s196 = scalar_lea.hbm %s0, %s195
          %s197 = sshll.u32 %s196, 4
          %s198 = int_to_ptr.hbm [resolvable:$true] %s197
          %s199 = sshll.u32 %s191, 4
          %s200 = int_to_ptr.vmem [resolvable:$true] %s199
          %205 = dma.hbm_to_vmem [thread:$0]  %s198, 4096, %s200, %s188, 1024, 1024, 64
        $region36: #{tpu_custom_call.1} parent=31 // pred_fallthru
          _
      $region32: #{tpu_custom_call.1} parent=5 // pred_fallthru
        _
      %p206 = scmp.le.s32.totalorder 1, %s17
      %p207 = scmp.lt.s32.totalorder %s17, 3
      %p208 = pnand %p206, %p207
      %p209 = pneg %p208
      // Predicated region
      $region37: #{tpu_custom_call.1} parent=5 // pred_check
        _
      $region38: #{tpu_custom_call.1} parent=5 // pred_check_branch
        %211 = sbr.rel (%p208) target = $region40
      $region39: #{tpu_custom_call.1} parent=5 // pred_region
        %s212 = ssub.s32 %s17, 1
        %s213 = sand.u32 %s30, 1
        %s214 = scalar_lea.sflag [#allocation4], %s213
        %s215 = sand.u32 %s30, 1
        %s216 = smul.addr %s215, 256
        %s217 = scalar_lea.vmem [#allocation3], %s216
        // Predicated region
        $region41: #{tpu_custom_call.1} parent=39 // pred_check
          %p218 = pneg %p43
        $region42: #{tpu_custom_call.1} parent=39 // pred_check_branch
          %220 = sbr.rel (%p218) target = $region44
        $region43: #{tpu_custom_call.1} parent=39 // pred_region
          %222 = dma.done %s214, 4096
        $region44: #{tpu_custom_call.1} parent=39 // pred_fallthru
          _
        %s223 = sand.u32 %s30, 1
        %s224 = scalar_lea.sflag [#allocation4], %s223
        %s225 = sand.u32 %s30, 1
        %s226 = smul.addr %s225, 256
        %s227 = scalar_lea.vmem [#allocation3], %s226
        %p228 = pneg %p43
        %p229 = pneg %p40
        %p230 = pneg %p64
        %p231 = pneg %p61
        %p232 = pneg %p85
        %p233 = pneg %p82
        %p234 = pneg %p106
        %p235 = pneg %p103
        %p236 = pneg %p127
        %p237 = pneg %p124
        %p238 = pneg %p153
        %p239 = pneg %p150
        %s240 = sand.u32 %s140, 1
        %s241 = scalar_lea.sflag [#allocation5], %s240
        %s242 = sand.u32 %s140, 1
        %s243 = smul.addr %s242, 256
        %s244 = scalar_lea.vmem [#allocation6], %s243
        %245 = vst [vmem:[#allocation2] sm:$0xff] 0.0
        %246 = vst [vmem:[#allocation2 + $0x8] sm:$0xff] 0.0
        %247 = vst [vmem:[#allocation2 + $0x10] sm:$0xff] 0.0
        %248 = vst [vmem:[#allocation2 + $0x18] sm:$0xff] 0.0
        %v249 = vld [vmem:[#allocation2] sm:$0xff]
        %v250 = vld [vmem:[#allocation2 + $0x8] sm:$0xff]
        %v251 = vld [vmem:[#allocation2 + $0x10] sm:$0xff]
        %v252 = vld [vmem:[#allocation2 + $0x18] sm:$0xff]
        %v253 = vld [vmem:[%s217] sm:$0xff]
        %v254 = vld [vmem:[%s217 + $0x40] sm:$0xff]
        %v255 = vld [vmem:[%s217 + $0x80] sm:$0xff]
        %v256 = vld [vmem:[%s217 + $0xc0] sm:$0xff]
        %v257 = vadd.f32 %v249, %v253
        %v258 = vadd.f32 %v250, %v254
        %v259 = vadd.f32 %v251, %v255
        %v260 = vadd.f32 %v252, %v256
        %261 = vst [vmem:[#allocation2] sm:$0xff] %v257
        %262 = vst [vmem:[#allocation2 + $0x8] sm:$0xff] %v258
        %263 = vst [vmem:[#allocation2 + $0x10] sm:$0xff] %v259
        %264 = vst [vmem:[#allocation2 + $0x18] sm:$0xff] %v260
        %v265 = vld [vmem:[#allocation2] sm:$0xff]
        %v266 = vld [vmem:[#allocation2 + $0x8] sm:$0xff]
        %v267 = vld [vmem:[#allocation2 + $0x10] sm:$0xff]
        %v268 = vld [vmem:[#allocation2 + $0x18] sm:$0xff]
        %s269 = scalar_lea.vmem %s217, 8 [#allocation3]
        %v270 = vld [vmem:[%s269] sm:$0xff]
        %v271 = vld [vmem:[%s269 + $0x40] sm:$0xff]
        %v272 = vld [vmem:[%s269 + $0x80] sm:$0xff]
        %v273 = vld [vmem:[%s269 + $0xc0] sm:$0xff]
        %v274 = vadd.f32 %v265, %v270
        %v275 = vadd.f32 %v266, %v271
        %v276 = vadd.f32 %v267, %v272
        %v277 = vadd.f32 %v268, %v273
        %278 = vst [vmem:[#allocation2] sm:$0xff] %v274
        %279 = vst [vmem:[#allocation2 + $0x8] sm:$0xff] %v275
        %280 = vst [vmem:[#allocation2 + $0x10] sm:$0xff] %v276
        %281 = vst [vmem:[#allocation2 + $0x18] sm:$0xff] %v277
        %v282 = vld [vmem:[#allocation2] sm:$0xff]
        %v283 = vld [vmem:[#allocation2 + $0x8] sm:$0xff]
        %v284 = vld [vmem:[#allocation2 + $0x10] sm:$0xff]
        %v285 = vld [vmem:[#allocation2 + $0x18] sm:$0xff]
        %s286 = scalar_lea.vmem %s217, 16 [#allocation3]
        %v287 = vld [vmem:[%s286] sm:$0xff]
        %v288 = vld [vmem:[%s286 + $0x40] sm:$0xff]
        %v289 = vld [vmem:[%s286 + $0x80] sm:$0xff]
        %v290 = vld [vmem:[%s286 + $0xc0] sm:$0xff]
        %v291 = vadd.f32 %v282, %v287
        %v292 = vadd.f32 %v283, %v288
        %v293 = vadd.f32 %v284, %v289
        %v294 = vadd.f32 %v285, %v290
        %295 = vst [vmem:[#allocation2] sm:$0xff] %v291
        %296 = vst [vmem:[#allocation2 + $0x8] sm:$0xff] %v292
        %297 = vst [vmem:[#allocation2 + $0x10] sm:$0xff] %v293
        %298 = vst [vmem:[#allocation2 + $0x18] sm:$0xff] %v294
        %v299 = vld [vmem:[#allocation2] sm:$0xff]
        %v300 = vld [vmem:[#allocation2 + $0x8] sm:$0xff]
        %v301 = vld [vmem:[#allocation2 + $0x10] sm:$0xff]
        %v302 = vld [vmem:[#allocation2 + $0x18] sm:$0xff]
        %s303 = scalar_lea.vmem %s217, 24 [#allocation3]
        %v304 = vld [vmem:[%s303] sm:$0xff]
        %v305 = vld [vmem:[%s303 + $0x40] sm:$0xff]
        %v306 = vld [vmem:[%s303 + $0x80] sm:$0xff]
        %v307 = vld [vmem:[%s303 + $0xc0] sm:$0xff]
        %v308 = vadd.f32 %v299, %v304
        %v309 = vadd.f32 %v300, %v305
        %v310 = vadd.f32 %v301, %v306
        %v311 = vadd.f32 %v302, %v307
        %312 = vst [vmem:[#allocation2] sm:$0xff] %v308
        %313 = vst [vmem:[#allocation2 + $0x8] sm:$0xff] %v309
        %314 = vst [vmem:[#allocation2 + $0x10] sm:$0xff] %v310
        %315 = vst [vmem:[#allocation2 + $0x18] sm:$0xff] %v311
        %v316 = vld [vmem:[#allocation2] sm:$0xff]
        %v317 = vld [vmem:[#allocation2 + $0x8] sm:$0xff]
        %v318 = vld [vmem:[#allocation2 + $0x10] sm:$0xff]
        %v319 = vld [vmem:[#allocation2 + $0x18] sm:$0xff]
        %s320 = scalar_lea.vmem %s217, 32 [#allocation3]
        %v321 = vld [vmem:[%s320] sm:$0xff]
        %v322 = vld [vmem:[%s320 + $0x40] sm:$0xff]
        %v323 = vld [vmem:[%s320 + $0x80] sm:$0xff]
        %v324 = vld [vmem:[%s320 + $0xc0] sm:$0xff]
        %v325 = vadd.f32 %v316, %v321
        %v326 = vadd.f32 %v317, %v322
        %v327 = vadd.f32 %v318, %v323
        %v328 = vadd.f32 %v319, %v324
        %329 = vst [vmem:[#allocation2] sm:$0xff] %v325
        %330 = vst [vmem:[#allocation2 + $0x8] sm:$0xff] %v326
        %331 = vst [vmem:[#allocation2 + $0x10] sm:$0xff] %v327
        %332 = vst [vmem:[#allocation2 + $0x18] sm:$0xff] %v328
        %v333 = vld [vmem:[#allocation2] sm:$0xff]
        %v334 = vld [vmem:[#allocation2 + $0x8] sm:$0xff]
        %v335 = vld [vmem:[#allocation2 + $0x10] sm:$0xff]
        %v336 = vld [vmem:[#allocation2 + $0x18] sm:$0xff]
        %s337 = scalar_lea.vmem %s217, 40 [#allocation3]
        %v338 = vld [vmem:[%s337] sm:$0xff]
        %v339 = vld [vmem:[%s337 + $0x40] sm:$0xff]
        %v340 = vld [vmem:[%s337 + $0x80] sm:$0xff]
        %v341 = vld [vmem:[%s337 + $0xc0] sm:$0xff]
        %v342 = vadd.f32 %v333, %v338
        %v343 = vadd.f32 %v334, %v339
        %v344 = vadd.f32 %v335, %v340
        %v345 = vadd.f32 %v336, %v341
        %346 = vst [vmem:[#allocation2] sm:$0xff] %v342
        %347 = vst [vmem:[#allocation2 + $0x8] sm:$0xff] %v343
        %348 = vst [vmem:[#allocation2 + $0x10] sm:$0xff] %v344
        %349 = vst [vmem:[#allocation2 + $0x18] sm:$0xff] %v345
        %v350 = vld [vmem:[#allocation2] sm:$0xff]
        %v351 = vld [vmem:[#allocation2 + $0x8] sm:$0xff]
        %v352 = vld [vmem:[#allocation2 + $0x10] sm:$0xff]
        %v353 = vld [vmem:[#allocation2 + $0x18] sm:$0xff]
        %s354 = scalar_lea.vmem %s217, 48 [#allocation3]
        %v355 = vld [vmem:[%s354] sm:$0xff]
        %v356 = vld [vmem:[%s354 + $0x40] sm:$0xff]
        %v357 = vld [vmem:[%s354 + $0x80] sm:$0xff]
        %v358 = vld [vmem:[%s354 + $0xc0] sm:$0xff]
        %v359 = vadd.f32 %v350, %v355
        %v360 = vadd.f32 %v351, %v356
        %v361 = vadd.f32 %v352, %v357
        %v362 = vadd.f32 %v353, %v358
        %363 = vst [vmem:[#allocation2] sm:$0xff] %v359
        %364 = vst [vmem:[#allocation2 + $0x8] sm:$0xff] %v360
        %365 = vst [vmem:[#allocation2 + $0x10] sm:$0xff] %v361
        %366 = vst [vmem:[#allocation2 + $0x18] sm:$0xff] %v362
        %v367 = vld [vmem:[#allocation2] sm:$0xff]
        %v368 = vld [vmem:[#allocation2 + $0x8] sm:$0xff]
        %v369 = vld [vmem:[#allocation2 + $0x10] sm:$0xff]
        %v370 = vld [vmem:[#allocation2 + $0x18] sm:$0xff]
        %s371 = scalar_lea.vmem %s217, 56 [#allocation3]
        %v372 = vld [vmem:[%s371] sm:$0xff]
        %v373 = vld [vmem:[%s371 + $0x40] sm:$0xff]
        %v374 = vld [vmem:[%s371 + $0x80] sm:$0xff]
        %v375 = vld [vmem:[%s371 + $0xc0] sm:$0xff]
        %v376 = vadd.f32 %v367, %v372
        %v377 = vadd.f32 %v368, %v373
        %v378 = vadd.f32 %v369, %v374
        %v379 = vadd.f32 %v370, %v375
        %380 = vst [vmem:[#allocation2] sm:$0xff] %v376
        %381 = vst [vmem:[#allocation2 + $0x8] sm:$0xff] %v377
        %382 = vst [vmem:[#allocation2 + $0x10] sm:$0xff] %v378
        %383 = vst [vmem:[#allocation2 + $0x18] sm:$0xff] %v379
        %v384 = vld [vmem:[#allocation2] sm:$0xff]
        %v385 = vld [vmem:[#allocation2 + $0x8] sm:$0xff]
        %v386 = vld [vmem:[#allocation2 + $0x10] sm:$0xff]
        %v387 = vld [vmem:[#allocation2 + $0x18] sm:$0xff]
        %388 = vadd.xlane.f32.xlu0 %v384
        %v389 = vpop.xlane.xlu0 %388
        %390 = vadd.xlane.f32.xlu0 %v385
        %v391 = vpop.xlane.xlu0 %390
        %392 = vadd.xlane.f32.xlu0 %v386
        %v393 = vpop.xlane.xlu0 %392
        %394 = vadd.xlane.f32.xlu0 %v387
        %v395 = vpop.xlane.xlu0 %394
        %v396 = vmul.f32 %v389, 0.0009765625
        %v397 = vmul.f32 %v391, 0.0009765625
        %v398 = vmul.f32 %v393, 0.0009765625
        %v399 = vmul.f32 %v395, 0.0009765625
        %v400 = vld [vmem:[%s1] sm:$0xff]
        %v401 = vld [vmem:[%s2] sm:$0xff]
        %vm402 = vcmask 261120
        %v404 = vsel %vm402, %v400, 0
        %406 = vmatpush.msra.mxu0 0.0
        %407 = vmatpush.msra.mxu0 0.0
        %408 = vmatpush.msra.mxu0 0.0
        %409 = vmatpush.msra.mxu0 0.0
        %410 = vmatpush.msra.mxu0 0.0
        %411 = vmatpush.msra.mxu0 0.0
        %412 = vmatpush.msra.mxu0 0.0
        %413 = vmatpush.msra.mxu0 0.0
        %414 = vmatpush.msra.mxu0 0.0
        %415 = vmatpush.msra.mxu0 0.0
        %416 = vmatpush.msra.mxu0 0.0
        %417 = vmatpush.msra.mxu0 0.0
        %418 = vmatpush.msra.mxu0 %v399
        %419 = vmatpush.msra.mxu0 %v398
        %420 = vmatpush.msra.mxu0 %v397
        %421 = vmatpush.msra.mxu0 %v396
        %422 = vmatmul.f32.gmra.mxu0 %v404
        %v423 = vpop.f32.mrf.mxu0
        %v424 = vadd.f32 %v401, %v423
        %425 = vdwg.mxu0
        %v426 = vmax.f32 %v424, 0.0
        %v427 = vld [vmem:[%s3] sm:$0xff]
        %v428 = vld [vmem:[%s3 + $0x8] sm:$0xff]
        %v429 = vld [vmem:[%s3 + $0x10] sm:$0xff]
        %v430 = vld [vmem:[%s3 + $0x18] sm:$0xff]
        %v431 = vld [vmem:[%s4] sm:$0xff]
        %v432 = vld [vmem:[%s4 + $0x8] sm:$0xff]
        %v433 = vld [vmem:[%s4 + $0x10] sm:$0xff]
        %v434 = vld [vmem:[%s4 + $0x18] sm:$0xff]
        %vm435 = vcmask 64512
        %v437 = vsel %vm435, %v427, 0
        %v440 = vsel %vm435, %v428, 0
        %v443 = vsel %vm435, %v429, 0
        %v446 = vsel %vm435, %v430, 0
        %448 = vmatpush.msra.mxu0 0.0
        %449 = vmatpush.msra.mxu0 0.0
        %450 = vmatpush.msra.mxu0 0.0
        %451 = vmatpush.msra.mxu0 0.0
        %452 = vmatpush.msra.mxu0 0.0
        %453 = vmatpush.msra.mxu0 0.0
        %454 = vmatpush.msra.mxu0 0.0
        %455 = vmatpush.msra.mxu0 0.0
        %456 = vmatpush.msra.mxu0 0.0
        %457 = vmatpush.msra.mxu0 0.0
        %458 = vmatpush.msra.mxu0 0.0
        %459 = vmatpush.msra.mxu0 0.0
        %460 = vmatpush.msra.mxu0 0.0
        %461 = vmatpush.msra.mxu0 0.0
        %462 = vmatpush.msra.mxu0 0.0
        %463 = vmatpush.msra.mxu0 %v426
        %464 = vmatmul.f32.gmra.mxu0 %v437
        %v465 = vpop.f32.mrf.mxu0
        %v466 = vadd.f32 %v431, %v465
        %467 = vmatmul.f32.gmra.mxu0 %v440
        %v468 = vpop.f32.mrf.mxu0
        %v469 = vadd.f32 %v432, %v468
        %470 = vmatmul.f32.gmra.mxu0 %v443
        %v471 = vpop.f32.mrf.mxu0
        %v472 = vadd.f32 %v433, %v471
        %473 = vmatmul.f32.gmra.mxu0 %v446
        %v474 = vpop.f32.mrf.mxu0
        %v475 = vadd.f32 %v434, %v474
        %476 = vdwg.mxu0
        %v477 = vadd.f32 %v466, 3.0
        %v478 = vadd.f32 %v469, 3.0
        %v479 = vadd.f32 %v472, 3.0
        %v480 = vadd.f32 %v475, 3.0
        %v481 = vmax.f32 %v477, 0.0
        %v482 = vmax.f32 %v478, 0.0
        %v483 = vmax.f32 %v479, 0.0
        %v484 = vmax.f32 %v480, 0.0
        %v485 = vmin.f32 %v481, 6.0
        %v486 = vmin.f32 %v482, 6.0
        %v487 = vmin.f32 %v483, 6.0
        %v488 = vmin.f32 %v484, 6.0
        %v489 = vmul.f32 %v485, 0.16666667
        %v490 = vmul.f32 %v486, 0.16666667
        %v491 = vmul.f32 %v487, 0.16666667
        %v492 = vmul.f32 %v488, 0.16666667
        %v493 = vld [vmem:[%s217] sm:$0xff]
        %v494 = vld [vmem:[%s217 + $0x8] sm:$0xff]
        %v495 = vld [vmem:[%s217 + $0x10] sm:$0xff]
        %v496 = vld [vmem:[%s217 + $0x18] sm:$0xff]
        %v497 = vld [vmem:[%s217 + $0x20] sm:$0xff]
        %v498 = vld [vmem:[%s217 + $0x28] sm:$0xff]
        %v499 = vld [vmem:[%s217 + $0x30] sm:$0xff]
        %v500 = vld [vmem:[%s217 + $0x38] sm:$0xff]
        %v501 = vld [vmem:[%s217 + $0x40] sm:$0xff]
        %v502 = vld [vmem:[%s217 + $0x48] sm:$0xff]
        %v503 = vld [vmem:[%s217 + $0x50] sm:$0xff]
        %v504 = vld [vmem:[%s217 + $0x58] sm:$0xff]
        %v505 = vld [vmem:[%s217 + $0x60] sm:$0xff]
        %v506 = vld [vmem:[%s217 + $0x68] sm:$0xff]
        %v507 = vld [vmem:[%s217 + $0x70] sm:$0xff]
        %v508 = vld [vmem:[%s217 + $0x78] sm:$0xff]
        %v509 = vld [vmem:[%s217 + $0x80] sm:$0xff]
        %v510 = vld [vmem:[%s217 + $0x88] sm:$0xff]
        %v511 = vld [vmem:[%s217 + $0x90] sm:$0xff]
        %v512 = vld [vmem:[%s217 + $0x98] sm:$0xff]
        %v513 = vld [vmem:[%s217 + $0xa0] sm:$0xff]
        %v514 = vld [vmem:[%s217 + $0xa8] sm:$0xff]
        %v515 = vld [vmem:[%s217 + $0xb0] sm:$0xff]
        %v516 = vld [vmem:[%s217 + $0xb8] sm:$0xff]
        %v517 = vld [vmem:[%s217 + $0xc0] sm:$0xff]
        %v518 = vld [vmem:[%s217 + $0xc8] sm:$0xff]
        %v519 = vld [vmem:[%s217 + $0xd0] sm:$0xff]
        %v520 = vld [vmem:[%s217 + $0xd8] sm:$0xff]
        %v521 = vld [vmem:[%s217 + $0xe0] sm:$0xff]
        %v522 = vld [vmem:[%s217 + $0xe8] sm:$0xff]
        %v523 = vld [vmem:[%s217 + $0xf0] sm:$0xff]
        %v524 = vld [vmem:[%s217 + $0xf8] sm:$0xff]
        %526 = vset.pattern.permute.xlu0 0
        %527 = vperm.xlu0 %526, %v489
        %v528 = vpop.permute.xlu0 %527
        %531 = vset.pattern.permute.xlu0 0
        %532 = vperm.xlu0 %531, %v490
        %v533 = vpop.permute.xlu0 %532
        %536 = vset.pattern.permute.xlu0 0
        %537 = vperm.xlu0 %536, %v491
        %v538 = vpop.permute.xlu0 %537
        %541 = vset.pattern.permute.xlu0 0
        %542 = vperm.xlu0 %541, %v492
        %v543 = vpop.permute.xlu0 %542
        %v545 = vmul.f32 %v493, %v528
        %v546 = vmul.f32 %v494, %v528
        %v547 = vmul.f32 %v495, %v528
        %v548 = vmul.f32 %v496, %v528
        %v549 = vmul.f32 %v497, %v528
        %v550 = vmul.f32 %v498, %v528
        %v551 = vmul.f32 %v499, %v528
        %v552 = vmul.f32 %v500, %v528
        %v553 = vmul.f32 %v501, %v533
        %v554 = vmul.f32 %v502, %v533
        %v555 = vmul.f32 %v503, %v533
        %v556 = vmul.f32 %v504, %v533
        %v557 = vmul.f32 %v505, %v533
        %v558 = vmul.f32 %v506, %v533
        %v559 = vmul.f32 %v507, %v533
        %v560 = vmul.f32 %v508, %v533
        %v561 = vmul.f32 %v509, %v538
        %v562 = vmul.f32 %v510, %v538
        %v563 = vmul.f32 %v511, %v538
        %v564 = vmul.f32 %v512, %v538
        %v565 = vmul.f32 %v513, %v538
        %v566 = vmul.f32 %v514, %v538
        %v567 = vmul.f32 %v515, %v538
        %v568 = vmul.f32 %v516, %v538
        %v569 = vmul.f32 %v517, %v543
        %v570 = vmul.f32 %v518, %v543
        %v571 = vmul.f32 %v519, %v543
        %v572 = vmul.f32 %v520, %v543
        %v573 = vmul.f32 %v521, %v543
        %v574 = vmul.f32 %v522, %v543
        %v575 = vmul.f32 %v523, %v543
        %v576 = vmul.f32 %v524, %v543
        %577 = vst [vmem:[%s244] sm:$0xff] %v545
        %578 = vst [vmem:[%s244 + $0x8] sm:$0xff] %v546
        %579 = vst [vmem:[%s244 + $0x10] sm:$0xff] %v547
        %580 = vst [vmem:[%s244 + $0x18] sm:$0xff] %v548
        %581 = vst [vmem:[%s244 + $0x20] sm:$0xff] %v549
        %582 = vst [vmem:[%s244 + $0x28] sm:$0xff] %v550
        %583 = vst [vmem:[%s244 + $0x30] sm:$0xff] %v551
        %584 = vst [vmem:[%s244 + $0x38] sm:$0xff] %v552
        %585 = vst [vmem:[%s244 + $0x40] sm:$0xff] %v553
        %586 = vst [vmem:[%s244 + $0x48] sm:$0xff] %v554
        %587 = vst [vmem:[%s244 + $0x50] sm:$0xff] %v555
        %588 = vst [vmem:[%s244 + $0x58] sm:$0xff] %v556
        %589 = vst [vmem:[%s244 + $0x60] sm:$0xff] %v557
        %590 = vst [vmem:[%s244 + $0x68] sm:$0xff] %v558
        %591 = vst [vmem:[%s244 + $0x70] sm:$0xff] %v559
        %592 = vst [vmem:[%s244 + $0x78] sm:$0xff] %v560
        %593 = vst [vmem:[%s244 + $0x80] sm:$0xff] %v561
        %594 = vst [vmem:[%s244 + $0x88] sm:$0xff] %v562
        %595 = vst [vmem:[%s244 + $0x90] sm:$0xff] %v563
        %596 = vst [vmem:[%s244 + $0x98] sm:$0xff] %v564
        %597 = vst [vmem:[%s244 + $0xa0] sm:$0xff] %v565
        %598 = vst [vmem:[%s244 + $0xa8] sm:$0xff] %v566
        %599 = vst [vmem:[%s244 + $0xb0] sm:$0xff] %v567
        %600 = vst [vmem:[%s244 + $0xb8] sm:$0xff] %v568
        %601 = vst [vmem:[%s244 + $0xc0] sm:$0xff] %v569
        %602 = vst [vmem:[%s244 + $0xc8] sm:$0xff] %v570
        %603 = vst [vmem:[%s244 + $0xd0] sm:$0xff] %v571
        %604 = vst [vmem:[%s244 + $0xd8] sm:$0xff] %v572
        %605 = vst [vmem:[%s244 + $0xe0] sm:$0xff] %v573
        %606 = vst [vmem:[%s244 + $0xe8] sm:$0xff] %v574
        %607 = vst [vmem:[%s244 + $0xf0] sm:$0xff] %v575
        %608 = vst [vmem:[%s244 + $0xf8] sm:$0xff] %v576
        %s609 = sand.u32 %s140, 1
        %s610 = scalar_lea.sflag [#allocation5], %s609
        %s611 = sand.u32 %s140, 1
        %s612 = smul.addr %s611, 256
        %s613 = scalar_lea.vmem [#allocation6], %s612
        // Predicated region
        $region45: #{tpu_custom_call.1} parent=39 // pred_check
          %p614 = pneg %p150
        $region46: #{tpu_custom_call.1} parent=39 // pred_check_branch
          %616 = sbr.rel (%p614) target = $region48
        $region47: #{tpu_custom_call.1} parent=39 // pred_region
          %618 = vsyncadd %s610, 0
          %s619 = smul.addr %s22, 32
          %s620 = smul.addr %s619, 8
          %s621 = scalar_lea.hbm %s5, %s620
          %s622 = sshll.u32 %s613, 4
          %s623 = int_to_ptr.vmem [resolvable:$true] %s622
          %s624 = sshll.u32 %s621, 4
          %s625 = int_to_ptr.hbm [resolvable:$true] %s624
          %630 = dma.vmem_to_hbm [thread:$0]  %s623, 4096, %s625, %s610, 1024, 1024, 64
        $region48: #{tpu_custom_call.1} parent=39 // pred_fallthru
          _
      $region40: #{tpu_custom_call.1} parent=5 // pred_fallthru
        _
      %p631 = scmp.le.s32.totalorder 2, %s17
      // Predicated region
      $region49: #{tpu_custom_call.1} parent=5 // pred_check
        %p632 = pneg %p631
      $region50: #{tpu_custom_call.1} parent=5 // pred_check_branch
        %634 = sbr.rel (%p632) target = $region52
      $region51: #{tpu_custom_call.1} parent=5 // pred_region
        %s635 = ssub.s32 %s17, 2
        // Predicated region
        $region53: #{tpu_custom_call.1} parent=51 // pred_check
          %p636 = pneg %p156
        $region54: #{tpu_custom_call.1} parent=51 // pred_check_branch
          %638 = sbr.rel (%p636) target = $region56
        $region55: #{tpu_custom_call.1} parent=51 // pred_region
          %s639 = sand.u32 %s141, 1
          %s640 = scalar_lea.sflag [#allocation5], %s639
          %s641 = sand.u32 %s141, 1
          %s642 = smul.addr %s641, 256
          %s643 = scalar_lea.vmem [#allocation6], %s642
          %645 = dma.done %s640, 4096
        $region56: #{tpu_custom_call.1} parent=51 // pred_fallthru
          _
      $region52: #{tpu_custom_call.1} parent=5 // pred_fallthru
        _
    $region6: #{tpu_custom_call.1} parent=1 // loop_footer
      %s21 = sadd.s32 1, %s17
    $region7: #{tpu_custom_call.1} parent=1 // loop_footer_branch
      %16 = sbr.rel target = $region3
    $region8: #{tpu_custom_call.1} parent=1 // loop_exit
      _
    %646 = vsyncpa [#allocation4], 1
    %s647 = scalar_lea.sflag [#allocation4], 1
    %648 = vsyncpa %s647, 1
    %649 = vsyncpa [#allocation5], 1
    %s650 = scalar_lea.sflag [#allocation5], 1
    %651 = vsyncpa %s650, 1

</llo_original>
